<compile_context>
chip_gen: v7x
topology: tpu7x:2x2x1
jax: 0.10.0
libtpu: 0.0.40
codegen_flags: <defaults>
</compile_context>

<pallas_src>
import functools

import jax
import jax.numpy as jnp
from jax import lax
from jax.experimental import pallas as pl
from jax.experimental.pallas import tpu as pltpu


# ---------------------------------------------------------------------------
# Kernel 1: Attention_Block MLP + softmax(logits / temperature) -> (B, K).
# ---------------------------------------------------------------------------
def _attention_scores_kernel(temp_ref, pooled_ref, w1t_ref, b1_ref, w2t_ref,
                             b2_ref, scores_ref):
    pooled = pooled_ref[...]                                      # (B, C_in)
    h = jnp.dot(pooled, w1t_ref[...], preferred_element_type=jnp.float32)
    h = jnp.maximum(h + b1_ref[...], 0.0)                         # Dense + ReLU
    logits = jnp.dot(h, w2t_ref[...], preferred_element_type=jnp.float32)
    logits = (logits + b2_ref[...]) / temp_ref[0]                 # temperature
    logits = logits - jnp.max(logits, axis=-1, keepdims=True)
    e = jnp.exp(logits)
    scores_ref[...] = e / jnp.sum(e, axis=-1, keepdims=True)      # (B, K)


def _attention_scores_call(pooled, params, temperature):
    B = pooled.shape[0]
    K = params["bank_b"].shape[0]
    temp = jnp.asarray([temperature], jnp.float32)
    vmem = pl.BlockSpec(memory_space=pltpu.MemorySpace.VMEM)
    return pl.pallas_call(
        _attention_scores_kernel,
        out_shape=jax.ShapeDtypeStruct((B, K), jnp.float32),
        in_specs=[pl.BlockSpec(memory_space=pltpu.MemorySpace.SMEM),  # temperature
                  vmem, vmem, vmem, vmem, vmem],
        out_specs=vmem,
        compiler_params=pltpu.CompilerParams(vmem_limit_bytes=32 * 1024 * 1024),
    )(temp, pooled, params["w1t"], params["b1"], params["w2t"], params["b2"])


# ---------------------------------------------------------------------------
# Kernel 2: fused per-sample dynamic conv.
#   - builds the ks*ks tap matrix with lane rolls (XLU) + precomputed masks,
#     writing bf16 taps (plus a ones row for the bias fold) into VMEM scratch,
#   - ONE shared (K*C_out, flat+1) @ (flat+1, HW) MXU matmul gives all K
#     candidate outputs (conv_k(x) + b_k),
#   - mixes them with the sample's attention scores (SMEM scalars, K FMAs),
#   - optional fused ReLU epilogue,
#   - emits the next layer's AdaptiveAvgPool as a second output.
# ---------------------------------------------------------------------------
def _dynamic_conv_kernel(H, W, ks, C_in, C_out, K, fuse_relu,
                         scores_ref, x_ref, bank_ref, mask_ref,
                         o_ref, pooled_ref, taps_ref):
    HW = H * W
    flat = ks * ks * C_in
    b = pl.program_id(0)
    x = x_ref[0]                                      # (C_in, HW) f32
    r = ks // 2
    tap = 0
    for dy in range(-r, r + 1):
        for dx in range(-r, r + 1):
            off = dy * W + dx
            if off == 0:
                shifted = x
            else:
                shifted = pltpu.roll(x, shift=(-off) % HW, axis=1)
            if dy == 0 and dx == 0:
                t = shifted
            else:
                t = shifted * mask_ref[tap:tap + 1, :]            # zero 'same' padding
            taps_ref[tap * C_in:(tap + 1) * C_in, :] = t.astype(taps_ref.dtype)
            tap += 1
    # Ones row: the bank's last column is the per-(k, c_out) bias, so the bias
    # is folded into the matmul (no lane-sparse bias input).
    taps_ref[flat:flat + 1, :] = jnp.ones((1, HW), taps_ref.dtype)

    # All K candidate outputs at once: (K*C_out, HW), f32 accumulation.
    cand = jnp.dot(bank_ref[...], taps_ref[...],
                   preferred_element_type=jnp.float32)

    # Mix candidates with this sample's attention scores (SMEM scalars).
    out = scores_ref[b, 0] * cand[0:C_out, :]
    for k in range(1, K):
        out = out + scores_ref[b, k] * cand[k * C_out:(k + 1) * C_out, :]

    if fuse_relu:
        out = jnp.maximum(out, 0.0)                   # fused ReLU epilogue
    o_ref[0] = out.astype(o_ref.dtype)
    # Next layer's AdaptiveAvgPool2d((1,1)) — lane reduction, hides under MXU.
    pooled_ref[0] = jnp.mean(out, axis=1, keepdims=True)


def _dynamic_conv_call(x_flat, scores, bank_ko, masks, H, W, ks, K,
                       fuse_relu, mxu_dtype):
    B, C_in, HW = x_flat.shape
    KC, flat1 = bank_ko.shape
    C_out = KC // K
    flat = flat1 - 1
    kernel = functools.partial(_dynamic_conv_kernel, H, W, ks, C_in, C_out, K,
                               fuse_relu)
    out, pooled = pl.pallas_call(
        kernel,
        out_shape=(jax.ShapeDtypeStruct((B, C_out, HW), jnp.float32),
                   jax.ShapeDtypeStruct((B, C_out, 1), jnp.float32)),
        grid_spec=pltpu.PrefetchScalarGridSpec(
            num_scalar_prefetch=0,
            grid=(B,),
            in_specs=[
                pl.BlockSpec(memory_space=pltpu.MemorySpace.SMEM),      # scores (B,K)
                pl.BlockSpec((1, C_in, HW), lambda b: (b, 0, 0)),       # x block
                pl.BlockSpec((KC, flat1), lambda b: (0, 0)),            # bank (resident)
                pl.BlockSpec((ks * ks, HW), lambda b: (0, 0)),          # masks (resident)
            ],
            out_specs=(
                pl.BlockSpec((1, C_out, HW), lambda b: (b, 0, 0)),
                pl.BlockSpec((1, C_out, 1), lambda b: (b, 0, 0)),
            ),
            scratch_shapes=[pltpu.VMEM((flat + 1, HW), mxu_dtype)],
        ),
        compiler_params=pltpu.CompilerParams(
            dimension_semantics=("parallel",),        # 2 grid steps -> both TCs on v7x
            vmem_limit_bytes=32 * 1024 * 1024),
    )(scores, x_flat, bank_ko, masks)
    return out, pooled


# ---------------------------------------------------------------------------
# Standalone ReLU fallback (a ReLU directly after a DynamicConv2d is fused
# into the conv epilogue instead, so the demo never hits this path).
# ---------------------------------------------------------------------------
def _relu_kernel(x_ref, o_ref):
    o_ref[...] = jnp.maximum(x_ref[...], 0.0)


def relu_pallas_flat(x_flat):
    # TODO(synk): if this fallback is ever used at scale, give it a grid with
    # large lane-dense blocks instead of the grid-less whole-array call.
    return pl.pallas_call(
        _relu_kernel,
        out_shape=jax.ShapeDtypeStruct(x_flat.shape, x_flat.dtype),
    )(x_flat)


# ---------------------------------------------------------------------------
# Wrappers.
# ---------------------------------------------------------------------------
def _boundary_masks(H, W, ks, dtype=jnp.float32):
    """(ks*ks, H*W) validity masks reproducing 'same' zero-padding."""
    r = ks // 2
    pos = jnp.arange(H * W)
    yy = pos // W
    xx = pos % W
    rows = []
    for dy in range(-r, r + 1):
        for dx in range(-r, r + 1):
            valid = ((yy + dy >= 0) & (yy + dy < H) &
                     (xx + dx >= 0) & (xx + dx < W))
            rows.append(valid)
    return jnp.stack(rows, axis=0).astype(dtype)


def dynamic_conv2d_pallas(x_flat, pooled, params, temperature, H, W,
                          fuse_relu=False, mxu_dtype=jnp.bfloat16):
    """One DynamicConv2d layer on the lane-dense (B, C, H*W) layout.

    Returns (out_flat, pooled_next) where pooled_next is the AdaptiveAvgPool
    of the (optionally ReLU'd) output, ready for the next layer's attention.
    """
    # TODO(synk): only stride=1, dilation=1, groups=1, 'same' padding is
    # implemented (the configuration used by the demo layers).
    B, C_in, HW = x_flat.shape
    K, C_out = params["bank_b"].shape
    ks = params["bank_w"].shape[-1]
    scores = _attention_scores_call(pooled, params, temperature)       # (B, K)
    bank_ko = params["bank_ko"].astype(mxu_dtype)                      # (K*C_out, flat+1)
    masks = _boundary_masks(H, W, ks)                                  # (ks*ks, HW)
    out_flat, pooled_next = _dynamic_conv_call(
        x_flat, scores, bank_ko, masks, H, W, ks, K, fuse_relu, mxu_dtype)
    return out_flat, pooled_next.reshape(B, C_out)


def dynamic_sequential_pallas(x_nchw, layers, condition, mxu_dtype=jnp.bfloat16):
    """Mirrors Dynamic_Sequential.forward: DynamicConv2d gets (x, condition);
    a ReLU that immediately follows a DynamicConv2d is fused into its epilogue."""
    B, C, H, W = x_nchw.shape
    x_flat = x_nchw.reshape(B, C, H * W)              # no transpose, lane-dense
    pooled = None
    i = 0
    while i < len(layers):
        kind, p = layers[i]
        if kind == "dynamic_conv":
            if pooled is None:                        # first layer / after fallback
                pooled = jnp.mean(x_flat, axis=-1)    # AdaptiveAvgPool2d((1,1))
            fuse_relu = (i + 1 < len(layers)) and layers[i + 1][0] == "relu"
            x_flat, pooled = dynamic_conv2d_pallas(
                x_flat, pooled, p, condition, H, W, fuse_relu, mxu_dtype)
            i += 2 if fuse_relu else 1
        elif kind == "relu":
            x_flat = relu_pallas_flat(x_flat)
            pooled = None
            i += 1
        else:
            raise ValueError(kind)
    C_last = x_flat.shape[1]
    return x_flat.reshape(B, C_last, H, W)


# ---------------------------------------------------------------------------
# Parameter construction + pure-JAX reference.
# ---------------------------------------------------------------------------
def init_dynamic_conv_params(key, in_channels, out_channels, kernel_size,
                             num_kernels=4, reduction_factor=4):
    bottleneck = in_channels // reduction_factor
    k = jax.random.split(key, 6)
    bank_w = jax.random.normal(
        k[0], (num_kernels, out_channels, in_channels, kernel_size, kernel_size),
        jnp.float32) * 0.1
    bank_b = jax.random.normal(k[1], (num_kernels, out_channels), jnp.float32) * 0.1
    w1 = jax.random.normal(k[2], (bottleneck, in_channels), jnp.float32) * 0.3
    b1 = jax.random.normal(k[3], (1, bottleneck), jnp.float32) * 0.1
    w2 = jax.random.normal(k[4], (num_kernels, bottleneck), jnp.float32) * 0.3
    b2 = jax.random.normal(k[5], (1, num_kernels), jnp.float32) * 0.1
    # Conv-kernel bank packed as (K*C_out, ks*ks*C_in + 1):
    #   row k*C_out + o, cols in [ky][kx][c_in] order (matches the in-kernel
    #   tap stacking), last col = bank_b[k, o] (bias folded into the matmul).
    bank_perm = jnp.transpose(bank_w, (0, 1, 3, 4, 2))     # (K, C_out, ky, kx, C_in)
    bank_flat = bank_perm.reshape(
        num_kernels * out_channels, kernel_size * kernel_size * in_channels)
    bank_ko = jnp.concatenate(
        [bank_flat, bank_b.reshape(num_kernels * out_channels, 1)], axis=1)
    return dict(bank_w=bank_w, bank_b=bank_b, bank_ko=bank_ko,
                w1=w1, b1=b1, w2=w2, b2=b2, w1t=w1.T, w2t=w2.T)


def dynamic_conv2d_ref(x, params, temperature):
    B, C_in, H, W = x.shape
    K, C_out, _, ks, _ = params["bank_w"].shape
    pooled = jnp.mean(x, axis=(2, 3))                              # (B, C_in)
    h = jax.nn.relu(pooled @ params["w1"].T + params["b1"])
    logits = h @ params["w2"].T + params["b2"]
    scores = jax.nn.softmax(logits / temperature, axis=-1)         # (B, K)
    w_mixed = jnp.einsum("bk,koiyx->boiyx", scores, params["bank_w"])
    b_mixed = scores @ params["bank_b"]                            # (B, C_out)
    pad = ks // 2
    outs = []
    for b in range(B):
        o = lax.conv_general_dilated(
            x[b:b + 1], w_mixed[b], window_strides=(1, 1),
            padding=((pad, pad), (pad, pad)),
            dimension_numbers=("NCHW", "OIHW", "NCHW"),
            precision=lax.Precision.HIGHEST)
        outs.append(o + b_mixed[b][None, :, None, None])
    return jnp.concatenate(outs, axis=0)


def dynamic_sequential_ref(x, layers, condition):
    for kind, p in layers:
        if kind == "dynamic_conv":
            x = dynamic_conv2d_ref(x, p, condition)
        elif kind == "relu":
            x = jax.nn.relu(x)
    return x


if __name__ == "__main__":
    jax.config.update("jax_default_matmul_precision", "highest")

    # Small demo: Dynamic_Sequential(DynamicConv2d, ReLU, DynamicConv2d)
    B, C0, C1, C2, H, W = 2, 16, 16, 16, 16, 16
    ks, num_kernels, reduction_factor = 3, 4, 4
    temperature = 4.0   # the "condition" passed to Dynamic_Sequential.forward

    root = jax.random.PRNGKey(0)
    kx, k1, k2 = jax.random.split(root, 3)
    x = jax.random.normal(kx, (B, C0, H, W), jnp.float32)

    layers = [
        ("dynamic_conv", init_dynamic_conv_params(k1, C0, C1, ks,
                                                  num_kernels, reduction_factor)),
        ("relu", None),
        ("dynamic_conv", init_dynamic_conv_params(k2, C1, C2, ks,
                                                  num_kernels, reduction_factor)),
    ]

    out = dynamic_sequential_pallas(x, layers, temperature)
    out = jax.block_until_ready(out)

    ref = dynamic_sequential_ref(x, layers, temperature)
    assert out.shape == (B, C2, H, W)
    err = jnp.max(jnp.abs(out - ref))
    # bf16 MXU inputs (f32 accumulation) vs. an all-f32 HIGHEST-precision
    # reference over two stacked conv layers -> relaxed tolerance.
    assert jnp.allclose(out, ref, atol=5e-2, rtol=5e-2), f"max abs err {err}"

    print("KERNEL_OK")
</pallas_src>

<mosaic_0001>
module attributes {stable_mosaic.version = 11 : i64} {
  func.func @_attention_scores_kernel(%arg0: memref<1xf32, #tpu.memory_space<smem>>, %arg1: memref<2x16xf32, #tpu.memory_space<vmem>>, %arg2: memref<16x4xf32, #tpu.memory_space<vmem>>, %arg3: memref<1x4xf32, #tpu.memory_space<vmem>>, %arg4: memref<4x4xf32, #tpu.memory_space<vmem>>, %arg5: memref<1x4xf32, #tpu.memory_space<vmem>>, %arg6: memref<2x4xf32, #tpu.memory_space<vmem>>) attributes {dimension_semantics = [], scalar_prefetch = 0 : i64, scratch_operands = 0 : i64, tpu.core_type = #tpu.core_type<tc>} {
    %c0 = arith.constant 0 : index
    %c0_0 = arith.constant 0 : index
    %0 = vector.load %arg1[%c0, %c0_0] : memref<2x16xf32, #tpu.memory_space<vmem>>, vector<2x16xf32>
    %c0_1 = arith.constant 0 : index
    %c0_2 = arith.constant 0 : index
    %1 = vector.load %arg2[%c0_1, %c0_2] : memref<16x4xf32, #tpu.memory_space<vmem>>, vector<16x4xf32>
    %cst = arith.constant dense<0.000000e+00> : vector<2x4xf32>
    %2 = tpu.matmul %0, %1, %cst {dimension_numbers = #tpu.dot_dimension_numbers<[1], [0], [0], [1], [0, 0, 1, 1], [], []>, precision = #tpu.contract_precision<fp32>} : vector<2x16xf32>, vector<16x4xf32>, vector<2x4xf32> -> vector<2x4xf32>
    %c0_3 = arith.constant 0 : index
    %c0_4 = arith.constant 0 : index
    %3 = vector.load %arg3[%c0_3, %c0_4] : memref<1x4xf32, #tpu.memory_space<vmem>>, vector<1x4xf32>
    %4 = vector.broadcast %3 : vector<1x4xf32> to vector<2x4xf32>
    %5 = arith.addf %2, %4 : vector<2x4xf32>
    %cst_5 = arith.constant 0.000000e+00 : f32
    %6 = vector.broadcast %cst_5 : f32 to vector<2x4xf32>
    %7 = arith.maximumf %5, %6 : vector<2x4xf32>
    %c0_6 = arith.constant 0 : index
    %c0_7 = arith.constant 0 : index
    %8 = vector.load %arg4[%c0_6, %c0_7] : memref<4x4xf32, #tpu.memory_space<vmem>>, vector<4x4xf32>
    %cst_8 = arith.constant dense<0.000000e+00> : vector<2x4xf32>
    %9 = tpu.matmul %7, %8, %cst_8 {dimension_numbers = #tpu.dot_dimension_numbers<[1], [0], [0], [1], [0, 0, 1, 1], [], []>, precision = #tpu.contract_precision<fp32>} : vector<2x4xf32>, vector<4x4xf32>, vector<2x4xf32> -> vector<2x4xf32>
    %c0_9 = arith.constant 0 : index
    %c0_10 = arith.constant 0 : index
    %10 = vector.load %arg5[%c0_9, %c0_10] : memref<1x4xf32, #tpu.memory_space<vmem>>, vector<1x4xf32>
    %11 = vector.broadcast %10 : vector<1x4xf32> to vector<2x4xf32>
    %12 = arith.addf %9, %11 : vector<2x4xf32>
    %c0_11 = arith.constant 0 : index
    %13 = memref.load %arg0[%c0_11] : memref<1xf32, #tpu.memory_space<smem>>
    %14 = vector.broadcast %13 : f32 to vector<2x4xf32>
    %15 = arith.divf %12, %14 : vector<2x4xf32>
    %cst_12 = arith.constant dense<0xFF800000> : vector<2xf32>
    %16 = vector.multi_reduction <maximumf>, %15, %cst_12 [1] : vector<2x4xf32> to vector<2xf32>
    %17 = vector.shape_cast %16 : vector<2xf32> to vector<2x1xf32>
    %18 = vector.broadcast %17 : vector<2x1xf32> to vector<2x4xf32>
    %19 = arith.subf %15, %18 : vector<2x4xf32>
    %20 = math.exp %19 : vector<2x4xf32>
    %cst_13 = arith.constant dense<0.000000e+00> : vector<2xf32>
    %21 = vector.multi_reduction <add>, %20, %cst_13 [1] : vector<2x4xf32> to vector<2xf32>
    %22 = vector.shape_cast %21 : vector<2xf32> to vector<2x1xf32>
    %23 = vector.broadcast %22 : vector<2x1xf32> to vector<2x4xf32>
    %24 = arith.divf %20, %23 : vector<2x4xf32>
    %c0_14 = arith.constant 0 : index
    %c0_15 = arith.constant 0 : index
    %25 = vector.load %arg6[%c0_14, %c0_15] : memref<2x4xf32, #tpu.memory_space<vmem>>, vector<2x4xf32>
    tpu.vector_store %arg6[%c0_14, %c0_15], %24 {strides = array<i32>} : memref<2x4xf32, #tpu.memory_space<vmem>>, vector<2x4xf32>,
    return
  }
}

</mosaic_0001>

<llo_original>
// kernel: tpu_custom_call.1
$region0: #{tpu_custom_call.1}
  #allocation0 [shape = 'u32[]', space=smem, size = 0x4, offset = 0x4, fixed_abs, tag = 'smem constant byte address 0x4 - core index']
  #allocation1 [shape = 'u32[144,128]{1,0:T(1,128)}', space=vmem, size = 0x12000, scoped, tag = 'internal scratch']
  #allocation2 [shape = 'f32[1]{0:T(128)S(6)}', space=smem, size = 0x200, scoped, tag = 'scoped memory for tpu_custom_call.1']
  %s0 = inlined_call_operand.<no memory space> [shape: f32[1], index: 0, kind: input, shape index: {}]
  %s1 = inlined_call_operand.vmem [shape: f32[2,16], index: 1, kind: input, shape index: {}]
  %s2 = inlined_call_operand.vmem [shape: f32[16,4], index: 2, kind: input, shape index: {}]
  %s3 = inlined_call_operand.vmem [shape: f32[1,4], index: 3, kind: input, shape index: {}]
  %s4 = inlined_call_operand.vmem [shape: f32[4,4], index: 4, kind: input, shape index: {}]
  %s5 = inlined_call_operand.vmem [shape: f32[1,4], index: 5, kind: input, shape index: {}]
  %s6 = inlined_call_operand.hbm [shape: f32[2,4], index: 6, kind: output, shape index: {}]
  %s7 = sld [smem:[#allocation0]]
  $region34: #{tpu_custom_call.1} parent=0
    _
  %s9 = ssub.s32 1, %s7
  %s10 = scalar_select 0, %s9, %s7
  %11 = sst [smem:[#allocation2]] %s0
  $region1: #{tpu_custom_call.1} parent=0
    #allocation3 [shape = 'u8[1024]{0}', space=vmem, size = 0x400, scoped, tag = 'output window, operand 0, single buffered']
    #allocation4 [shape = 's32[1]{0}', space=sflag, size = 0x4, scoped, tag = 'scoped memory for tpu_custom_call.1']
    %12 = vsyncpa [#allocation4], 0
    // Predicated region
    $region2: #{tpu_custom_call.1} parent=1 // pred_check
      _
    $region3: #{tpu_custom_call.1} parent=1 // pred_check_branch
      %14 = sbr.rel (0) target = $region5
    $region4: #{tpu_custom_call.1} parent=1 // pred_region
      _
    $region5: #{tpu_custom_call.1} parent=1 // pred_fallthru
      _
    // Predicated region
    $region6: #{tpu_custom_call.1} parent=1 // pred_check
      _
    $region7: #{tpu_custom_call.1} parent=1 // pred_check_branch
      %16 = sbr.rel (0) target = $region9
    $region8: #{tpu_custom_call.1} parent=1 // pred_region
      _
    $region9: #{tpu_custom_call.1} parent=1 // pred_fallthru
      _
    // Predicated region
    $region10: #{tpu_custom_call.1} parent=1 // pred_check
      _
    $region11: #{tpu_custom_call.1} parent=1 // pred_check_branch
      %18 = sbr.rel (0) target = $region13
    $region12: #{tpu_custom_call.1} parent=1 // pred_region
      _
    $region13: #{tpu_custom_call.1} parent=1 // pred_fallthru
      _
    // Predicated region
    $region14: #{tpu_custom_call.1} parent=1 // pred_check
      _
    $region15: #{tpu_custom_call.1} parent=1 // pred_check_branch
      %20 = sbr.rel (0) target = $region17
    $region16: #{tpu_custom_call.1} parent=1 // pred_region
      _
    $region17: #{tpu_custom_call.1} parent=1 // pred_fallthru
      _
    // Predicated region
    $region18: #{tpu_custom_call.1} parent=1 // pred_check
      _
    $region19: #{tpu_custom_call.1} parent=1 // pred_check_branch
      %22 = sbr.rel (0) target = $region21
    $region20: #{tpu_custom_call.1} parent=1 // pred_region
      _
    $region21: #{tpu_custom_call.1} parent=1 // pred_fallthru
      _
    // Predicated region
    $region22: #{tpu_custom_call.1} parent=1 // pred_check
      _
    $region23: #{tpu_custom_call.1} parent=1 // pred_check_branch
      %24 = sbr.rel (0) target = $region25
    $region24: #{tpu_custom_call.1} parent=1 // pred_region
      _
    $region25: #{tpu_custom_call.1} parent=1 // pred_fallthru
      _
    %v25 = vld [vmem:[%s1] sm:$0x3]
    %v26 = vld [vmem:[%s2] sm:$0xff]
    %v27 = vld [vmem:[%s2 + $0x8] sm:$0xff]
    %v28 = vld [vmem:[%s3] sm:$0x1]
    %v30 = vlaneseq
    %v31 = vshrl.u32 %v30, 7
    %v32 = vsub.s32 0, %v31
    %v33 = vrot.slane %v28, %v32
    %vm35 = vcmask 130048
    %v37 = vsel %vm35, %v25, 0
    %39 = vmatprep.subr.mxu0 0.0
    %v40 = vand.u32 %v26, 4294901760
    %41 = vmatpush1.msra.mxu0 %v40
    %42 = vmatprep.subr.mxu0 0.0
    %v43 = vand.u32 %v27, 4294901760
    %44 = vmatpush1.msra.mxu0 %v43
    %45 = vmatprep.subr.mxu0 0.0
    %46 = vmatpush1.msra.mxu0 0.0
    %47 = vmatprep.subr.mxu0 0.0
    %48 = vmatpush1.msra.mxu0 0.0
    %49 = vmatprep.subr.mxu0 0.0
    %50 = vmatpush1.msra.mxu0 0.0
    %51 = vmatprep.subr.mxu0 0.0
    %52 = vmatpush1.msra.mxu0 0.0
    %53 = vmatprep.subr.mxu0 0.0
    %54 = vmatpush1.msra.mxu0 0.0
    %55 = vmatprep.subr.mxu0 0.0
    %56 = vmatpush1.msra.mxu0 0.0
    %57 = vmatprep.subr.mxu0 0.0
    %58 = vmatpush1.msra.mxu0 0.0
    %59 = vmatprep.subr.mxu0 0.0
    %60 = vmatpush1.msra.mxu0 0.0
    %61 = vmatprep.subr.mxu0 0.0
    %62 = vmatpush1.msra.mxu0 0.0
    %63 = vmatprep.subr.mxu0 0.0
    %64 = vmatpush1.msra.mxu0 0.0
    %65 = vmatprep.subr.mxu0 0.0
    %66 = vmatpush1.msra.mxu0 0.0
    %67 = vmatprep.subr.mxu0 0.0
    %68 = vmatpush1.msra.mxu0 0.0
    %69 = vmatprep.subr.mxu0 0.0
    %70 = vmatpush1.msra.mxu0 0.0
    %71 = vmatprep.subr.mxu0 0.0
    %72 = vmatpush1.msra.mxu0 0.0
    %73 = vmatprep.subr.mxu0 0.0
    %74 = vmatpush1.msra.mxu0 0.0
    %75 = vmatprep.subr.mxu0 0.0
    %76 = vmatpush1.msra.mxu0 0.0
    %77 = vmatprep.subr.mxu0 0.0
    %78 = vmatpush1.msra.mxu0 0.0
    %79 = vmatprep.subr.mxu0 0.0
    %80 = vmatpush1.msra.mxu0 0.0
    %81 = vmatprep.subr.mxu0 0.0
    %82 = vmatpush1.msra.mxu0 0.0
    %83 = vmatprep.subr.mxu0 0.0
    %84 = vmatpush1.msra.mxu0 0.0
    %85 = vmatprep.subr.mxu0 0.0
    %86 = vmatpush1.msra.mxu0 0.0
    %87 = vmatprep.subr.mxu0 0.0
    %88 = vmatpush1.msra.mxu0 0.0
    %89 = vmatprep.subr.mxu0 0.0
    %90 = vmatpush1.msra.mxu0 0.0
    %91 = vmatprep.subr.mxu0 0.0
    %92 = vmatpush1.msra.mxu0 0.0
    %93 = vmatprep.subr.mxu0 0.0
    %94 = vmatpush1.msra.mxu0 0.0
    %95 = vmatprep.subr.mxu0 0.0
    %96 = vmatpush1.msra.mxu0 0.0
    %97 = vmatprep.subr.mxu0 0.0
    %98 = vmatpush1.msra.mxu0 0.0
    %99 = vmatprep.subr.mxu0 0.0
    %100 = vmatpush1.msra.mxu0 0.0
    %101 = vmatprep.subr.mxu0 0.0
    %102 = vmatpush1.msra.mxu0 0.0
    %103 = vmatprep.subr.mxu0 0.0
    %104 = vmatpush1.msra.mxu0 0.0
    %105 = vmatprep.mubr.f32.mxu0 0.0
    %v106 = vand.u32 %v37, 4294901760
    %v107 = vsub.f32 %v37, %v106
    %v108 = vand.u32 %v107, 4294901760
    %v109 = vsub.f32 %v107, %v108
    %v110 = vand.u32 %v109, 4294901760
    %111 = vmatmul.mubr.f32.gmra.mrb[0].mxu0 %v110
    %v112 = vpop.f32.mrb[0].mxu0
    %v113 = vadd.f32 %v33, %v112
    %v114 = vpop.f32.mrb[0].mxu0
    %115 = vdwg.mxu0
    %116 = vmatprep.subr.mxu0 0.0
    %v117 = vand.u32 %v26, 4294901760
    %v118 = vsub.f32 %v26, %v117
    %v119 = vand.u32 %v118, 4294901760
    %v120 = vsub.f32 %v118, %v119
    %v121 = vand.u32 %v120, 4294901760
    %122 = vmatpush1.msra.mxu0 %v121
    %123 = vmatprep.subr.mxu0 0.0
    %v124 = vand.u32 %v27, 4294901760
    %v125 = vsub.f32 %v27, %v124
    %v126 = vand.u32 %v125, 4294901760
    %v127 = vsub.f32 %v125, %v126
    %v128 = vand.u32 %v127, 4294901760
    %129 = vmatpush1.msra.mxu0 %v128
    %130 = vmatprep.subr.mxu0 0.0
    %131 = vmatpush1.msra.mxu0 0.0
    %132 = vmatprep.subr.mxu0 0.0
    %133 = vmatpush1.msra.mxu0 0.0
    %134 = vmatprep.subr.mxu0 0.0
    %135 = vmatpush1.msra.mxu0 0.0
    %136 = vmatprep.subr.mxu0 0.0
    %137 = vmatpush1.msra.mxu0 0.0
    %138 = vmatprep.subr.mxu0 0.0
    %139 = vmatpush1.msra.mxu0 0.0
    %140 = vmatprep.subr.mxu0 0.0
    %141 = vmatpush1.msra.mxu0 0.0
    %142 = vmatprep.subr.mxu0 0.0
    %143 = vmatpush1.msra.mxu0 0.0
    %144 = vmatprep.subr.mxu0 0.0
    %145 = vmatpush1.msra.mxu0 0.0
    %146 = vmatprep.subr.mxu0 0.0
    %147 = vmatpush1.msra.mxu0 0.0
    %148 = vmatprep.subr.mxu0 0.0
    %149 = vmatpush1.msra.mxu0 0.0
    %150 = vmatprep.subr.mxu0 0.0
    %151 = vmatpush1.msra.mxu0 0.0
    %152 = vmatprep.subr.mxu0 0.0
    %153 = vmatpush1.msra.mxu0 0.0
    %154 = vmatprep.subr.mxu0 0.0
    %155 = vmatpush1.msra.mxu0 0.0
    %156 = vmatprep.subr.mxu0 0.0
    %157 = vmatpush1.msra.mxu0 0.0
    %158 = vmatprep.subr.mxu0 0.0
    %159 = vmatpush1.msra.mxu0 0.0
    %160 = vmatprep.subr.mxu0 0.0
    %161 = vmatpush1.msra.mxu0 0.0
    %162 = vmatprep.subr.mxu0 0.0
    %163 = vmatpush1.msra.mxu0 0.0
    %164 = vmatprep.subr.mxu0 0.0
    %165 = vmatpush1.msra.mxu0 0.0
    %166 = vmatprep.subr.mxu0 0.0
    %167 = vmatpush1.msra.mxu0 0.0
    %168 = vmatprep.subr.mxu0 0.0
    %169 = vmatpush1.msra.mxu0 0.0
    %170 = vmatprep.subr.mxu0 0.0
    %171 = vmatpush1.msra.mxu0 0.0
    %172 = vmatprep.subr.mxu0 0.0
    %173 = vmatpush1.msra.mxu0 0.0
    %174 = vmatprep.subr.mxu0 0.0
    %175 = vmatpush1.msra.mxu0 0.0
    %176 = vmatprep.subr.mxu0 0.0
    %177 = vmatpush1.msra.mxu0 0.0
    %178 = vmatprep.subr.mxu0 0.0
    %179 = vmatpush1.msra.mxu0 0.0
    %180 = vmatprep.subr.mxu0 0.0
    %181 = vmatpush1.msra.mxu0 0.0
    %182 = vmatprep.subr.mxu0 0.0
    %183 = vmatpush1.msra.mxu0 0.0
    %184 = vmatprep.subr.mxu0 0.0
    %185 = vmatpush1.msra.mxu0 0.0
    %186 = vmatprep.subr.mxu0 0.0
    %187 = vmatpush1.msra.mxu0 0.0
    %188 = vmatprep.subr.mxu0 0.0
    %189 = vmatpush1.msra.mxu0 0.0
    %190 = vmatprep.mubr.f32.mxu0 0.0
    %v191 = vand.u32 %v37, 4294901760
    %192 = vmatmul.mubr.f32.gmra.mrb[0].mxu0 %v191
    %v193 = vpop.f32.mrb[0].mxu0
    %v194 = vadd.f32 %v113, %v193
    %v195 = vpop.f32.mrb[0].mxu0
    %196 = vdwg.mxu0
    %197 = vmatprep.subr.mxu0 0.0
    %v198 = vand.u32 %v26, 4294901760
    %v199 = vsub.f32 %v26, %v198
    %200 = vmatpush1.msra.mxu0 %v199
    %201 = vmatprep.subr.mxu0 0.0
    %v202 = vand.u32 %v27, 4294901760
    %v203 = vsub.f32 %v27, %v202
    %204 = vmatpush1.msra.mxu0 %v203
    %205 = vmatprep.subr.mxu0 0.0
    %206 = vmatpush1.msra.mxu0 0.0
    %207 = vmatprep.subr.mxu0 0.0
    %208 = vmatpush1.msra.mxu0 0.0
    %209 = vmatprep.subr.mxu0 0.0
    %210 = vmatpush1.msra.mxu0 0.0
    %211 = vmatprep.subr.mxu0 0.0
    %212 = vmatpush1.msra.mxu0 0.0
    %213 = vmatprep.subr.mxu0 0.0
    %214 = vmatpush1.msra.mxu0 0.0
    %215 = vmatprep.subr.mxu0 0.0
    %216 = vmatpush1.msra.mxu0 0.0
    %217 = vmatprep.subr.mxu0 0.0
    %218 = vmatpush1.msra.mxu0 0.0
    %219 = vmatprep.subr.mxu0 0.0
    %220 = vmatpush1.msra.mxu0 0.0
    %221 = vmatprep.subr.mxu0 0.0
    %222 = vmatpush1.msra.mxu0 0.0
    %223 = vmatprep.subr.mxu0 0.0
    %224 = vmatpush1.msra.mxu0 0.0
    %225 = vmatprep.subr.mxu0 0.0
    %226 = vmatpush1.msra.mxu0 0.0
    %227 = vmatprep.subr.mxu0 0.0
    %228 = vmatpush1.msra.mxu0 0.0
    %229 = vmatprep.subr.mxu0 0.0
    %230 = vmatpush1.msra.mxu0 0.0
    %231 = vmatprep.subr.mxu0 0.0
    %232 = vmatpush1.msra.mxu0 0.0
    %233 = vmatprep.subr.mxu0 0.0
    %234 = vmatpush1.msra.mxu0 0.0
    %235 = vmatprep.subr.mxu0 0.0
    %236 = vmatpush1.msra.mxu0 0.0
    %237 = vmatprep.subr.mxu0 0.0
    %238 = vmatpush1.msra.mxu0 0.0
    %239 = vmatprep.subr.mxu0 0.0
    %240 = vmatpush1.msra.mxu0 0.0
    %241 = vmatprep.subr.mxu0 0.0
    %242 = vmatpush1.msra.mxu0 0.0
    %243 = vmatprep.subr.mxu0 0.0
    %244 = vmatpush1.msra.mxu0 0.0
    %245 = vmatprep.subr.mxu0 0.0
    %246 = vmatpush1.msra.mxu0 0.0
    %247 = vmatprep.subr.mxu0 0.0
    %248 = vmatpush1.msra.mxu0 0.0
    %249 = vmatprep.subr.mxu0 0.0
    %250 = vmatpush1.msra.mxu0 0.0
    %251 = vmatprep.subr.mxu0 0.0
    %252 = vmatpush1.msra.mxu0 0.0
    %253 = vmatprep.subr.mxu0 0.0
    %254 = vmatpush1.msra.mxu0 0.0
    %255 = vmatprep.subr.mxu0 0.0
    %256 = vmatpush1.msra.mxu0 0.0
    %257 = vmatprep.subr.mxu0 0.0
    %258 = vmatpush1.msra.mxu0 0.0
    %259 = vmatprep.subr.mxu0 0.0
    %260 = vmatpush1.msra.mxu0 0.0
    %261 = vmatprep.subr.mxu0 0.0
    %262 = vmatpush1.msra.mxu0 0.0
    %263 = vmatprep.subr.mxu0 0.0
    %264 = vmatpush1.msra.mxu0 0.0
    %265 = vmatprep.mubr.f32.mxu0 0.0
    %v266 = vand.u32 %v37, 4294901760
    %v267 = vsub.f32 %v37, %v266
    %268 = vmatmul.mubr.f32.gmra.mrb[0].mxu0 %v267
    %v269 = vpop.f32.mrb[0].mxu0
    %v270 = vadd.f32 %v194, %v269
    %v271 = vpop.f32.mrb[0].mxu0
    %272 = vdwg.mxu0
    %273 = vmatprep.subr.mxu0 0.0
    %v274 = vand.u32 %v26, 4294901760
    %275 = vmatpush1.msra.mxu0 %v274
    %276 = vmatprep.subr.mxu0 0.0
    %v277 = vand.u32 %v27, 4294901760
    %278 = vmatpush1.msra.mxu0 %v277
    %279 = vmatprep.subr.mxu0 0.0
    %280 = vmatpush1.msra.mxu0 0.0
    %281 = vmatprep.subr.mxu0 0.0
    %282 = vmatpush1.msra.mxu0 0.0
    %283 = vmatprep.subr.mxu0 0.0
    %284 = vmatpush1.msra.mxu0 0.0
    %285 = vmatprep.subr.mxu0 0.0
    %286 = vmatpush1.msra.mxu0 0.0
    %287 = vmatprep.subr.mxu0 0.0
    %288 = vmatpush1.msra.mxu0 0.0
    %289 = vmatprep.subr.mxu0 0.0
    %290 = vmatpush1.msra.mxu0 0.0
    %291 = vmatprep.subr.mxu0 0.0
    %292 = vmatpush1.msra.mxu0 0.0
    %293 = vmatprep.subr.mxu0 0.0
    %294 = vmatpush1.msra.mxu0 0.0
    %295 = vmatprep.subr.mxu0 0.0
    %296 = vmatpush1.msra.mxu0 0.0
    %297 = vmatprep.subr.mxu0 0.0
    %298 = vmatpush1.msra.mxu0 0.0
    %299 = vmatprep.subr.mxu0 0.0
    %300 = vmatpush1.msra.mxu0 0.0
    %301 = vmatprep.subr.mxu0 0.0
    %302 = vmatpush1.msra.mxu0 0.0
    %303 = vmatprep.subr.mxu0 0.0
    %304 = vmatpush1.msra.mxu0 0.0
    %305 = vmatprep.subr.mxu0 0.0
    %306 = vmatpush1.msra.mxu0 0.0
    %307 = vmatprep.subr.mxu0 0.0
    %308 = vmatpush1.msra.mxu0 0.0
    %309 = vmatprep.subr.mxu0 0.0
    %310 = vmatpush1.msra.mxu0 0.0
    %311 = vmatprep.subr.mxu0 0.0
    %312 = vmatpush1.msra.mxu0 0.0
    %313 = vmatprep.subr.mxu0 0.0
    %314 = vmatpush1.msra.mxu0 0.0
    %315 = vmatprep.subr.mxu0 0.0
    %316 = vmatpush1.msra.mxu0 0.0
    %317 = vmatprep.subr.mxu0 0.0
    %318 = vmatpush1.msra.mxu0 0.0
    %319 = vmatprep.subr.mxu0 0.0
    %320 = vmatpush1.msra.mxu0 0.0
    %321 = vmatprep.subr.mxu0 0.0
    %322 = vmatpush1.msra.mxu0 0.0
    %323 = vmatprep.subr.mxu0 0.0
    %324 = vmatpush1.msra.mxu0 0.0
    %325 = vmatprep.subr.mxu0 0.0
    %326 = vmatpush1.msra.mxu0 0.0
    %327 = vmatprep.subr.mxu0 0.0
    %328 = vmatpush1.msra.mxu0 0.0
    %329 = vmatprep.subr.mxu0 0.0
    %330 = vmatpush1.msra.mxu0 0.0
    %331 = vmatprep.subr.mxu0 0.0
    %332 = vmatpush1.msra.mxu0 0.0
    %333 = vmatprep.subr.mxu0 0.0
    %334 = vmatpush1.msra.mxu0 0.0
    %335 = vmatprep.subr.mxu0 0.0
    %336 = vmatpush1.msra.mxu0 0.0
    %337 = vmatprep.subr.mxu0 0.0
    %338 = vmatpush1.msra.mxu0 0.0
    %339 = vmatprep.mubr.f32.mxu0 0.0
    %v340 = vand.u32 %v37, 4294901760
    %v341 = vsub.f32 %v37, %v340
    %v342 = vand.u32 %v341, 4294901760
    %343 = vmatmul.mubr.f32.gmra.mrb[0].mxu0 %v342
    %v344 = vpop.f32.mrb[0].mxu0
    %v345 = vadd.f32 %v270, %v344
    %v346 = vpop.f32.mrb[0].mxu0
    %347 = vdwg.mxu0
    %348 = vmatprep.subr.mxu0 0.0
    %v349 = vand.u32 %v26, 4294901760
    %v350 = vsub.f32 %v26, %v349
    %v351 = vand.u32 %v350, 4294901760
    %352 = vmatpush1.msra.mxu0 %v351
    %353 = vmatprep.subr.mxu0 0.0
    %v354 = vand.u32 %v27, 4294901760
    %v355 = vsub.f32 %v27, %v354
    %v356 = vand.u32 %v355, 4294901760
    %357 = vmatpush1.msra.mxu0 %v356
    %358 = vmatprep.subr.mxu0 0.0
    %359 = vmatpush1.msra.mxu0 0.0
    %360 = vmatprep.subr.mxu0 0.0
    %361 = vmatpush1.msra.mxu0 0.0
    %362 = vmatprep.subr.mxu0 0.0
    %363 = vmatpush1.msra.mxu0 0.0
    %364 = vmatprep.subr.mxu0 0.0
    %365 = vmatpush1.msra.mxu0 0.0
    %366 = vmatprep.subr.mxu0 0.0
    %367 = vmatpush1.msra.mxu0 0.0
    %368 = vmatprep.subr.mxu0 0.0
    %369 = vmatpush1.msra.mxu0 0.0
    %370 = vmatprep.subr.mxu0 0.0
    %371 = vmatpush1.msra.mxu0 0.0
    %372 = vmatprep.subr.mxu0 0.0
    %373 = vmatpush1.msra.mxu0 0.0
    %374 = vmatprep.subr.mxu0 0.0
    %375 = vmatpush1.msra.mxu0 0.0
    %376 = vmatprep.subr.mxu0 0.0
    %377 = vmatpush1.msra.mxu0 0.0
    %378 = vmatprep.subr.mxu0 0.0
    %379 = vmatpush1.msra.mxu0 0.0
    %380 = vmatprep.subr.mxu0 0.0
    %381 = vmatpush1.msra.mxu0 0.0
    %382 = vmatprep.subr.mxu0 0.0
    %383 = vmatpush1.msra.mxu0 0.0
    %384 = vmatprep.subr.mxu0 0.0
    %385 = vmatpush1.msra.mxu0 0.0
    %386 = vmatprep.subr.mxu0 0.0
    %387 = vmatpush1.msra.mxu0 0.0
    %388 = vmatprep.subr.mxu0 0.0
    %389 = vmatpush1.msra.mxu0 0.0
    %390 = vmatprep.subr.mxu0 0.0
    %391 = vmatpush1.msra.mxu0 0.0
    %392 = vmatprep.subr.mxu0 0.0
    %393 = vmatpush1.msra.mxu0 0.0
    %394 = vmatprep.subr.mxu0 0.0
    %395 = vmatpush1.msra.mxu0 0.0
    %396 = vmatprep.subr.mxu0 0.0
    %397 = vmatpush1.msra.mxu0 0.0
    %398 = vmatprep.subr.mxu0 0.0
    %399 = vmatpush1.msra.mxu0 0.0
    %400 = vmatprep.subr.mxu0 0.0
    %401 = vmatpush1.msra.mxu0 0.0
    %402 = vmatprep.subr.mxu0 0.0
    %403 = vmatpush1.msra.mxu0 0.0
    %404 = vmatprep.subr.mxu0 0.0
    %405 = vmatpush1.msra.mxu0 0.0
    %406 = vmatprep.subr.mxu0 0.0
    %407 = vmatpush1.msra.mxu0 0.0
    %408 = vmatprep.subr.mxu0 0.0
    %409 = vmatpush1.msra.mxu0 0.0
    %410 = vmatprep.subr.mxu0 0.0
    %411 = vmatpush1.msra.mxu0 0.0
    %412 = vmatprep.subr.mxu0 0.0
    %413 = vmatpush1.msra.mxu0 0.0
    %414 = vmatprep.subr.mxu0 0.0
    %415 = vmatpush1.msra.mxu0 0.0
    %416 = vmatprep.subr.mxu0 0.0
    %417 = vmatpush1.msra.mxu0 0.0
    %418 = vmatprep.mubr.f32.mxu0 0.0
    %v419 = vand.u32 %v37, 4294901760
    %420 = vmatmul.mubr.f32.gmra.mrb[0].mxu0 %v419
    %v421 = vpop.f32.mrb[0].mxu0
    %v422 = vadd.f32 %v345, %v421
    %v423 = vpop.f32.mrb[0].mxu0
    %424 = vdwg.mxu0
    %425 = vmatprep.subr.mxu0 0.0
    %v426 = vand.u32 %v26, 4294901760
    %427 = vmatpush1.msra.mxu0 %v426
    %428 = vmatprep.subr.mxu0 0.0
    %v429 = vand.u32 %v27, 4294901760
    %430 = vmatpush1.msra.mxu0 %v429
    %431 = vmatprep.subr.mxu0 0.0
    %432 = vmatpush1.msra.mxu0 0.0
    %433 = vmatprep.subr.mxu0 0.0
    %434 = vmatpush1.msra.mxu0 0.0
    %435 = vmatprep.subr.mxu0 0.0
    %436 = vmatpush1.msra.mxu0 0.0
    %437 = vmatprep.subr.mxu0 0.0
    %438 = vmatpush1.msra.mxu0 0.0
    %439 = vmatprep.subr.mxu0 0.0
    %440 = vmatpush1.msra.mxu0 0.0
    %441 = vmatprep.subr.mxu0 0.0
    %442 = vmatpush1.msra.mxu0 0.0
    %443 = vmatprep.subr.mxu0 0.0
    %444 = vmatpush1.msra.mxu0 0.0
    %445 = vmatprep.subr.mxu0 0.0
    %446 = vmatpush1.msra.mxu0 0.0
    %447 = vmatprep.subr.mxu0 0.0
    %448 = vmatpush1.msra.mxu0 0.0
    %449 = vmatprep.subr.mxu0 0.0
    %450 = vmatpush1.msra.mxu0 0.0
    %451 = vmatprep.subr.mxu0 0.0
    %452 = vmatpush1.msra.mxu0 0.0
    %453 = vmatprep.subr.mxu0 0.0
    %454 = vmatpush1.msra.mxu0 0.0
    %455 = vmatprep.subr.mxu0 0.0
    %456 = vmatpush1.msra.mxu0 0.0
    %457 = vmatprep.subr.mxu0 0.0
    %458 = vmatpush1.msra.mxu0 0.0
    %459 = vmatprep.subr.mxu0 0.0
    %460 = vmatpush1.msra.mxu0 0.0
    %461 = vmatprep.subr.mxu0 0.0
    %462 = vmatpush1.msra.mxu0 0.0
    %463 = vmatprep.subr.mxu0 0.0
    %464 = vmatpush1.msra.mxu0 0.0
    %465 = vmatprep.subr.mxu0 0.0
    %466 = vmatpush1.msra.mxu0 0.0
    %467 = vmatprep.subr.mxu0 0.0
    %468 = vmatpush1.msra.mxu0 0.0
    %469 = vmatprep.subr.mxu0 0.0
    %470 = vmatpush1.msra.mxu0 0.0
    %471 = vmatprep.subr.mxu0 0.0
    %472 = vmatpush1.msra.mxu0 0.0
    %473 = vmatprep.subr.mxu0 0.0
    %474 = vmatpush1.msra.mxu0 0.0
    %475 = vmatprep.subr.mxu0 0.0
    %476 = vmatpush1.msra.mxu0 0.0
    %477 = vmatprep.subr.mxu0 0.0
    %478 = vmatpush1.msra.mxu0 0.0
    %479 = vmatprep.subr.mxu0 0.0
    %480 = vmatpush1.msra.mxu0 0.0
    %481 = vmatprep.subr.mxu0 0.0
    %482 = vmatpush1.msra.mxu0 0.0
    %483 = vmatprep.subr.mxu0 0.0
    %484 = vmatpush1.msra.mxu0 0.0
    %485 = vmatprep.subr.mxu0 0.0
    %486 = vmatpush1.msra.mxu0 0.0
    %487 = vmatprep.subr.mxu0 0.0
    %488 = vmatpush1.msra.mxu0 0.0
    %489 = vmatprep.subr.mxu0 0.0
    %490 = vmatpush1.msra.mxu0 0.0
    %491 = vmatprep.mubr.f32.mxu0 0.0
    %v492 = vand.u32 %v37, 4294901760
    %493 = vmatmul.mubr.f32.gmra.mrb[0].mxu0 %v492
    %v494 = vpop.f32.mrb[0].mxu0
    %v495 = vadd.f32 %v422, %v494
    %v496 = vpop.f32.mrb[0].mxu0
    %497 = vdwg.mxu0
    %v498 = vmax.f32 %v495, 0.0
    %v499 = vld [vmem:[%s4] sm:$0xf]
    %v500 = vld [vmem:[%s5] sm:$0x1]
    %v502 = vlaneseq
    %v503 = vshrl.u32 %v502, 7
    %v504 = vsub.s32 0, %v503
    %v505 = vrot.slane %v500, %v504
    %vm507 = vcmask 31744
    %v509 = vsel %vm507, %v498, 0
    %vm511 = vcmask 1043456
    %v513 = vsel %vm511, %v499, 0
    %515 = vmatprep.subr.mxu0 0.0
    %v516 = vand.u32 %v513, 4294901760
    %517 = vmatpush1.msra.mxu0 %v516
    %518 = vmatprep.subr.mxu0 0.0
    %519 = vmatpush1.msra.mxu0 0.0
    %520 = vmatprep.subr.mxu0 0.0
    %521 = vmatpush1.msra.mxu0 0.0
    %522 = vmatprep.subr.mxu0 0.0
    %523 = vmatpush1.msra.mxu0 0.0
    %524 = vmatprep.subr.mxu0 0.0
    %525 = vmatpush1.msra.mxu0 0.0
    %526 = vmatprep.subr.mxu0 0.0
    %527 = vmatpush1.msra.mxu0 0.0
    %528 = vmatprep.subr.mxu0 0.0
    %529 = vmatpush1.msra.mxu0 0.0
    %530 = vmatprep.subr.mxu0 0.0
    %531 = vmatpush1.msra.mxu0 0.0
    %532 = vmatprep.subr.mxu0 0.0
    %533 = vmatpush1.msra.mxu0 0.0
    %534 = vmatprep.subr.mxu0 0.0
    %535 = vmatpush1.msra.mxu0 0.0
    %536 = vmatprep.subr.mxu0 0.0
    %537 = vmatpush1.msra.mxu0 0.0
    %538 = vmatprep.subr.mxu0 0.0
    %539 = vmatpush1.msra.mxu0 0.0
    %540 = vmatprep.subr.mxu0 0.0
    %541 = vmatpush1.msra.mxu0 0.0
    %542 = vmatprep.subr.mxu0 0.0
    %543 = vmatpush1.msra.mxu0 0.0
    %544 = vmatprep.subr.mxu0 0.0
    %545 = vmatpush1.msra.mxu0 0.0
    %546 = vmatprep.subr.mxu0 0.0
    %547 = vmatpush1.msra.mxu0 0.0
    %548 = vmatprep.subr.mxu0 0.0
    %549 = vmatpush1.msra.mxu0 0.0
    %550 = vmatprep.subr.mxu0 0.0
    %551 = vmatpush1.msra.mxu0 0.0
    %552 = vmatprep.subr.mxu0 0.0
    %553 = vmatpush1.msra.mxu0 0.0
    %554 = vmatprep.subr.mxu0 0.0
    %555 = vmatpush1.msra.mxu0 0.0
    %556 = vmatprep.subr.mxu0 0.0
    %557 = vmatpush1.msra.mxu0 0.0
    %558 = vmatprep.subr.mxu0 0.0
    %559 = vmatpush1.msra.mxu0 0.0
    %560 = vmatprep.subr.mxu0 0.0
    %561 = vmatpush1.msra.mxu0 0.0
    %562 = vmatprep.subr.mxu0 0.0
    %563 = vmatpush1.msra.mxu0 0.0
    %564 = vmatprep.subr.mxu0 0.0
    %565 = vmatpush1.msra.mxu0 0.0
    %566 = vmatprep.subr.mxu0 0.0
    %567 = vmatpush1.msra.mxu0 0.0
    %568 = vmatprep.subr.mxu0 0.0
    %569 = vmatpush1.msra.mxu0 0.0
    %570 = vmatprep.subr.mxu0 0.0
    %571 = vmatpush1.msra.mxu0 0.0
    %572 = vmatprep.subr.mxu0 0.0
    %573 = vmatpush1.msra.mxu0 0.0
    %574 = vmatprep.subr.mxu0 0.0
    %575 = vmatpush1.msra.mxu0 0.0
    %576 = vmatprep.subr.mxu0 0.0
    %577 = vmatpush1.msra.mxu0 0.0
    %578 = vmatprep.subr.mxu0 0.0
    %579 = vmatpush1.msra.mxu0 0.0
    %580 = vmatprep.mubr.f32.mxu0 0.0
    %v581 = vand.u32 %v509, 4294901760
    %v582 = vsub.f32 %v509, %v581
    %v583 = vand.u32 %v582, 4294901760
    %v584 = vsub.f32 %v582, %v583
    %v585 = vand.u32 %v584, 4294901760
    %586 = vmatmul.mubr.f32.gmra.mrb[0].mxu0 %v585
    %v587 = vpop.f32.mrb[0].mxu0
    %v588 = vadd.f32 %v505, %v587
    %v589 = vpop.f32.mrb[0].mxu0
    %590 = vdwg.mxu0
    %591 = vmatprep.subr.mxu0 0.0
    %v592 = vand.u32 %v513, 4294901760
    %v593 = vsub.f32 %v513, %v592
    %v594 = vand.u32 %v593, 4294901760
    %v595 = vsub.f32 %v593, %v594
    %v596 = vand.u32 %v595, 4294901760
    %597 = vmatpush1.msra.mxu0 %v596
    %598 = vmatprep.subr.mxu0 0.0
    %599 = vmatpush1.msra.mxu0 0.0
    %600 = vmatprep.subr.mxu0 0.0
    %601 = vmatpush1.msra.mxu0 0.0
    %602 = vmatprep.subr.mxu0 0.0
    %603 = vmatpush1.msra.mxu0 0.0
    %604 = vmatprep.subr.mxu0 0.0
    %605 = vmatpush1.msra.mxu0 0.0
    %606 = vmatprep.subr.mxu0 0.0
    %607 = vmatpush1.msra.mxu0 0.0
    %608 = vmatprep.subr.mxu0 0.0
    %609 = vmatpush1.msra.mxu0 0.0
    %610 = vmatprep.subr.mxu0 0.0
    %611 = vmatpush1.msra.mxu0 0.0
    %612 = vmatprep.subr.mxu0 0.0
    %613 = vmatpush1.msra.mxu0 0.0
    %614 = vmatprep.subr.mxu0 0.0
    %615 = vmatpush1.msra.mxu0 0.0
    %616 = vmatprep.subr.mxu0 0.0
    %617 = vmatpush1.msra.mxu0 0.0
    %618 = vmatprep.subr.mxu0 0.0
    %619 = vmatpush1.msra.mxu0 0.0
    %620 = vmatprep.subr.mxu0 0.0
    %621 = vmatpush1.msra.mxu0 0.0
    %622 = vmatprep.subr.mxu0 0.0
    %623 = vmatpush1.msra.mxu0 0.0
    %624 = vmatprep.subr.mxu0 0.0
    %625 = vmatpush1.msra.mxu0 0.0
    %626 = vmatprep.subr.mxu0 0.0
    %627 = vmatpush1.msra.mxu0 0.0
    %628 = vmatprep.subr.mxu0 0.0
    %629 = vmatpush1.msra.mxu0 0.0
    %630 = vmatprep.subr.mxu0 0.0
    %631 = vmatpush1.msra.mxu0 0.0
    %632 = vmatprep.subr.mxu0 0.0
    %633 = vmatpush1.msra.mxu0 0.0
    %634 = vmatprep.subr.mxu0 0.0
    %635 = vmatpush1.msra.mxu0 0.0
    %636 = vmatprep.subr.mxu0 0.0
    %637 = vmatpush1.msra.mxu0 0.0
    %638 = vmatprep.subr.mxu0 0.0
    %639 = vmatpush1.msra.mxu0 0.0
    %640 = vmatprep.subr.mxu0 0.0
    %641 = vmatpush1.msra.mxu0 0.0
    %642 = vmatprep.subr.mxu0 0.0
    %643 = vmatpush1.msra.mxu0 0.0
    %644 = vmatprep.subr.mxu0 0.0
    %645 = vmatpush1.msra.mxu0 0.0
    %646 = vmatprep.subr.mxu0 0.0
    %647 = vmatpush1.msra.mxu0 0.0
    %648 = vmatprep.subr.mxu0 0.0
    %649 = vmatpush1.msra.mxu0 0.0
    %650 = vmatprep.subr.mxu0 0.0
    %651 = vmatpush1.msra.mxu0 0.0
    %652 = vmatprep.subr.mxu0 0.0
    %653 = vmatpush1.msra.mxu0 0.0
    %654 = vmatprep.subr.mxu0 0.0
    %655 = vmatpush1.msra.mxu0 0.0
    %656 = vmatprep.subr.mxu0 0.0
    %657 = vmatpush1.msra.mxu0 0.0
    %658 = vmatprep.subr.mxu0 0.0
    %659 = vmatpush1.msra.mxu0 0.0
    %660 = vmatprep.mubr.f32.mxu0 0.0
    %v661 = vand.u32 %v509, 4294901760
    %662 = vmatmul.mubr.f32.gmra.mrb[0].mxu0 %v661
    %v663 = vpop.f32.mrb[0].mxu0
    %v664 = vadd.f32 %v588, %v663
    %v665 = vpop.f32.mrb[0].mxu0
    %666 = vdwg.mxu0
    %667 = vmatprep.subr.mxu0 0.0
    %v668 = vand.u32 %v513, 4294901760
    %v669 = vsub.f32 %v513, %v668
    %670 = vmatpush1.msra.mxu0 %v669
    %671 = vmatprep.subr.mxu0 0.0
    %672 = vmatpush1.msra.mxu0 0.0
    %673 = vmatprep.subr.mxu0 0.0
    %674 = vmatpush1.msra.mxu0 0.0
    %675 = vmatprep.subr.mxu0 0.0
    %676 = vmatpush1.msra.mxu0 0.0
    %677 = vmatprep.subr.mxu0 0.0
    %678 = vmatpush1.msra.mxu0 0.0
    %679 = vmatprep.subr.mxu0 0.0
    %680 = vmatpush1.msra.mxu0 0.0
    %681 = vmatprep.subr.mxu0 0.0
    %682 = vmatpush1.msra.mxu0 0.0
    %683 = vmatprep.subr.mxu0 0.0
    %684 = vmatpush1.msra.mxu0 0.0
    %685 = vmatprep.subr.mxu0 0.0
    %686 = vmatpush1.msra.mxu0 0.0
    %687 = vmatprep.subr.mxu0 0.0
    %688 = vmatpush1.msra.mxu0 0.0
    %689 = vmatprep.subr.mxu0 0.0
    %690 = vmatpush1.msra.mxu0 0.0
    %691 = vmatprep.subr.mxu0 0.0
    %692 = vmatpush1.msra.mxu0 0.0
    %693 = vmatprep.subr.mxu0 0.0
    %694 = vmatpush1.msra.mxu0 0.0
    %695 = vmatprep.subr.mxu0 0.0
    %696 = vmatpush1.msra.mxu0 0.0
    %697 = vmatprep.subr.mxu0 0.0
    %698 = vmatpush1.msra.mxu0 0.0
    %699 = vmatprep.subr.mxu0 0.0
    %700 = vmatpush1.msra.mxu0 0.0
    %701 = vmatprep.subr.mxu0 0.0
    %702 = vmatpush1.msra.mxu0 0.0
    %703 = vmatprep.subr.mxu0 0.0
    %704 = vmatpush1.msra.mxu0 0.0
    %705 = vmatprep.subr.mxu0 0.0
    %706 = vmatpush1.msra.mxu0 0.0
    %707 = vmatprep.subr.mxu0 0.0
    %708 = vmatpush1.msra.mxu0 0.0
    %709 = vmatprep.subr.mxu0 0.0
    %710 = vmatpush1.msra.mxu0 0.0
    %711 = vmatprep.subr.mxu0 0.0
    %712 = vmatpush1.msra.mxu0 0.0
    %713 = vmatprep.subr.mxu0 0.0
    %714 = vmatpush1.msra.mxu0 0.0
    %715 = vmatprep.subr.mxu0 0.0
    %716 = vmatpush1.msra.mxu0 0.0
    %717 = vmatprep.subr.mxu0 0.0
    %718 = vmatpush1.msra.mxu0 0.0
    %719 = vmatprep.subr.mxu0 0.0
    %720 = vmatpush1.msra.mxu0 0.0
    %721 = vmatprep.subr.mxu0 0.0
    %722 = vmatpush1.msra.mxu0 0.0
    %723 = vmatprep.subr.mxu0 0.0
    %724 = vmatpush1.msra.mxu0 0.0
    %725 = vmatprep.subr.mxu0 0.0
    %726 = vmatpush1.msra.mxu0 0.0
    %727 = vmatprep.subr.mxu0 0.0
    %728 = vmatpush1.msra.mxu0 0.0
    %729 = vmatprep.subr.mxu0 0.0
    %730 = vmatpush1.msra.mxu0 0.0
    %731 = vmatprep.subr.mxu0 0.0
    %732 = vmatpush1.msra.mxu0 0.0
    %733 = vmatprep.mubr.f32.mxu0 0.0
    %v734 = vand.u32 %v509, 4294901760
    %v735 = vsub.f32 %v509, %v734
    %736 = vmatmul.mubr.f32.gmra.mrb[0].mxu0 %v735
    %v737 = vpop.f32.mrb[0].mxu0
    %v738 = vadd.f32 %v664, %v737
    %v739 = vpop.f32.mrb[0].mxu0
    %740 = vdwg.mxu0
    %741 = vmatprep.subr.mxu0 0.0
    %v742 = vand.u32 %v513, 4294901760
    %743 = vmatpush1.msra.mxu0 %v742
    %744 = vmatprep.subr.mxu0 0.0
    %745 = vmatpush1.msra.mxu0 0.0
    %746 = vmatprep.subr.mxu0 0.0
    %747 = vmatpush1.msra.mxu0 0.0
    %748 = vmatprep.subr.mxu0 0.0
    %749 = vmatpush1.msra.mxu0 0.0
    %750 = vmatprep.subr.mxu0 0.0
    %751 = vmatpush1.msra.mxu0 0.0
    %752 = vmatprep.subr.mxu0 0.0
    %753 = vmatpush1.msra.mxu0 0.0
    %754 = vmatprep.subr.mxu0 0.0
    %755 = vmatpush1.msra.mxu0 0.0
    %756 = vmatprep.subr.mxu0 0.0
    %757 = vmatpush1.msra.mxu0 0.0
    %758 = vmatprep.subr.mxu0 0.0
    %759 = vmatpush1.msra.mxu0 0.0
    %760 = vmatprep.subr.mxu0 0.0
    %761 = vmatpush1.msra.mxu0 0.0
    %762 = vmatprep.subr.mxu0 0.0
    %763 = vmatpush1.msra.mxu0 0.0
    %764 = vmatprep.subr.mxu0 0.0
    %765 = vmatpush1.msra.mxu0 0.0
    %766 = vmatprep.subr.mxu0 0.0
    %767 = vmatpush1.msra.mxu0 0.0
    %768 = vmatprep.subr.mxu0 0.0
    %769 = vmatpush1.msra.mxu0 0.0
    %770 = vmatprep.subr.mxu0 0.0
    %771 = vmatpush1.msra.mxu0 0.0
    %772 = vmatprep.subr.mxu0 0.0
    %773 = vmatpush1.msra.mxu0 0.0
    %774 = vmatprep.subr.mxu0 0.0
    %775 = vmatpush1.msra.mxu0 0.0
    %776 = vmatprep.subr.mxu0 0.0
    %777 = vmatpush1.msra.mxu0 0.0
    %778 = vmatprep.subr.mxu0 0.0
    %779 = vmatpush1.msra.mxu0 0.0
    %780 = vmatprep.subr.mxu0 0.0
    %781 = vmatpush1.msra.mxu0 0.0
    %782 = vmatprep.subr.mxu0 0.0
    %783 = vmatpush1.msra.mxu0 0.0
    %784 = vmatprep.subr.mxu0 0.0
    %785 = vmatpush1.msra.mxu0 0.0
    %786 = vmatprep.subr.mxu0 0.0
    %787 = vmatpush1.msra.mxu0 0.0
    %788 = vmatprep.subr.mxu0 0.0
    %789 = vmatpush1.msra.mxu0 0.0
    %790 = vmatprep.subr.mxu0 0.0
    %791 = vmatpush1.msra.mxu0 0.0
    %792 = vmatprep.subr.mxu0 0.0
    %793 = vmatpush1.msra.mxu0 0.0
    %794 = vmatprep.subr.mxu0 0.0
    %795 = vmatpush1.msra.mxu0 0.0
    %796 = vmatprep.subr.mxu0 0.0
    %797 = vmatpush1.msra.mxu0 0.0
    %798 = vmatprep.subr.mxu0 0.0
    %799 = vmatpush1.msra.mxu0 0.0
    %800 = vmatprep.subr.mxu0 0.0
    %801 = vmatpush1.msra.mxu0 0.0
    %802 = vmatprep.subr.mxu0 0.0
    %803 = vmatpush1.msra.mxu0 0.0
    %804 = vmatprep.subr.mxu0 0.0
    %805 = vmatpush1.msra.mxu0 0.0
    %806 = vmatprep.mubr.f32.mxu0 0.0
    %v807 = vand.u32 %v509, 4294901760
    %v808 = vsub.f32 %v509, %v807
    %v809 = vand.u32 %v808, 4294901760
    %810 = vmatmul.mubr.f32.gmra.mrb[0].mxu0 %v809
    %v811 = vpop.f32.mrb[0].mxu0
    %v812 = vadd.f32 %v738, %v811
    %v813 = vpop.f32.mrb[0].mxu0
    %814 = vdwg.mxu0
    %815 = vmatprep.subr.mxu0 0.0
    %v816 = vand.u32 %v513, 4294901760
    %v817 = vsub.f32 %v513, %v816
    %v818 = vand.u32 %v817, 4294901760
    %819 = vmatpush1.msra.mxu0 %v818
    %820 = vmatprep.subr.mxu0 0.0
    %821 = vmatpush1.msra.mxu0 0.0
    %822 = vmatprep.subr.mxu0 0.0
    %823 = vmatpush1.msra.mxu0 0.0
    %824 = vmatprep.subr.mxu0 0.0
    %825 = vmatpush1.msra.mxu0 0.0
    %826 = vmatprep.subr.mxu0 0.0
    %827 = vmatpush1.msra.mxu0 0.0
    %828 = vmatprep.subr.mxu0 0.0
    %829 = vmatpush1.msra.mxu0 0.0
    %830 = vmatprep.subr.mxu0 0.0
    %831 = vmatpush1.msra.mxu0 0.0
    %832 = vmatprep.subr.mxu0 0.0
    %833 = vmatpush1.msra.mxu0 0.0
    %834 = vmatprep.subr.mxu0 0.0
    %835 = vmatpush1.msra.mxu0 0.0
    %836 = vmatprep.subr.mxu0 0.0
    %837 = vmatpush1.msra.mxu0 0.0
    %838 = vmatprep.subr.mxu0 0.0
    %839 = vmatpush1.msra.mxu0 0.0
    %840 = vmatprep.subr.mxu0 0.0
    %841 = vmatpush1.msra.mxu0 0.0
    %842 = vmatprep.subr.mxu0 0.0
    %843 = vmatpush1.msra.mxu0 0.0
    %844 = vmatprep.subr.mxu0 0.0
    %845 = vmatpush1.msra.mxu0 0.0
    %846 = vmatprep.subr.mxu0 0.0
    %847 = vmatpush1.msra.mxu0 0.0
    %848 = vmatprep.subr.mxu0 0.0
    %849 = vmatpush1.msra.mxu0 0.0
    %850 = vmatprep.subr.mxu0 0.0
    %851 = vmatpush1.msra.mxu0 0.0
    %852 = vmatprep.subr.mxu0 0.0
    %853 = vmatpush1.msra.mxu0 0.0
    %854 = vmatprep.subr.mxu0 0.0
    %855 = vmatpush1.msra.mxu0 0.0
    %856 = vmatprep.subr.mxu0 0.0
    %857 = vmatpush1.msra.mxu0 0.0
    %858 = vmatprep.subr.mxu0 0.0
    %859 = vmatpush1.msra.mxu0 0.0
    %860 = vmatprep.subr.mxu0 0.0
    %861 = vmatpush1.msra.mxu0 0.0
    %862 = vmatprep.subr.mxu0 0.0
    %863 = vmatpush1.msra.mxu0 0.0
    %864 = vmatprep.subr.mxu0 0.0
    %865 = vmatpush1.msra.mxu0 0.0
    %866 = vmatprep.subr.mxu0 0.0
    %867 = vmatpush1.msra.mxu0 0.0
    %868 = vmatprep.subr.mxu0 0.0
    %869 = vmatpush1.msra.mxu0 0.0
    %870 = vmatprep.subr.mxu0 0.0
    %871 = vmatpush1.msra.mxu0 0.0
    %872 = vmatprep.subr.mxu0 0.0
    %873 = vmatpush1.msra.mxu0 0.0
    %874 = vmatprep.subr.mxu0 0.0
    %875 = vmatpush1.msra.mxu0 0.0
    %876 = vmatprep.subr.mxu0 0.0
    %877 = vmatpush1.msra.mxu0 0.0
    %878 = vmatprep.subr.mxu0 0.0
    %879 = vmatpush1.msra.mxu0 0.0
    %880 = vmatprep.subr.mxu0 0.0
    %881 = vmatpush1.msra.mxu0 0.0
    %882 = vmatprep.mubr.f32.mxu0 0.0
    %v883 = vand.u32 %v509, 4294901760
    %884 = vmatmul.mubr.f32.gmra.mrb[0].mxu0 %v883
    %v885 = vpop.f32.mrb[0].mxu0
    %v886 = vadd.f32 %v812, %v885
    %v887 = vpop.f32.mrb[0].mxu0
    %888 = vdwg.mxu0
    %889 = vmatprep.subr.mxu0 0.0
    %v890 = vand.u32 %v513, 4294901760
    %891 = vmatpush1.msra.mxu0 %v890
    %892 = vmatprep.subr.mxu0 0.0
    %893 = vmatpush1.msra.mxu0 0.0
    %894 = vmatprep.subr.mxu0 0.0
    %895 = vmatpush1.msra.mxu0 0.0
    %896 = vmatprep.subr.mxu0 0.0
    %897 = vmatpush1.msra.mxu0 0.0
    %898 = vmatprep.subr.mxu0 0.0
    %899 = vmatpush1.msra.mxu0 0.0
    %900 = vmatprep.subr.mxu0 0.0
    %901 = vmatpush1.msra.mxu0 0.0
    %902 = vmatprep.subr.mxu0 0.0
    %903 = vmatpush1.msra.mxu0 0.0
    %904 = vmatprep.subr.mxu0 0.0
    %905 = vmatpush1.msra.mxu0 0.0
    %906 = vmatprep.subr.mxu0 0.0
    %907 = vmatpush1.msra.mxu0 0.0
    %908 = vmatprep.subr.mxu0 0.0
    %909 = vmatpush1.msra.mxu0 0.0
    %910 = vmatprep.subr.mxu0 0.0
    %911 = vmatpush1.msra.mxu0 0.0
    %912 = vmatprep.subr.mxu0 0.0
    %913 = vmatpush1.msra.mxu0 0.0
    %914 = vmatprep.subr.mxu0 0.0
    %915 = vmatpush1.msra.mxu0 0.0
    %916 = vmatprep.subr.mxu0 0.0
    %917 = vmatpush1.msra.mxu0 0.0
    %918 = vmatprep.subr.mxu0 0.0
    %919 = vmatpush1.msra.mxu0 0.0
    %920 = vmatprep.subr.mxu0 0.0
    %921 = vmatpush1.msra.mxu0 0.0
    %922 = vmatprep.subr.mxu0 0.0
    %923 = vmatpush1.msra.mxu0 0.0
    %924 = vmatprep.subr.mxu0 0.0
    %925 = vmatpush1.msra.mxu0 0.0
    %926 = vmatprep.subr.mxu0 0.0
    %927 = vmatpush1.msra.mxu0 0.0
    %928 = vmatprep.subr.mxu0 0.0
    %929 = vmatpush1.msra.mxu0 0.0
    %930 = vmatprep.subr.mxu0 0.0
    %931 = vmatpush1.msra.mxu0 0.0
    %932 = vmatprep.subr.mxu0 0.0
    %933 = vmatpush1.msra.mxu0 0.0
    %934 = vmatprep.subr.mxu0 0.0
    %935 = vmatpush1.msra.mxu0 0.0
    %936 = vmatprep.subr.mxu0 0.0
    %937 = vmatpush1.msra.mxu0 0.0
    %938 = vmatprep.subr.mxu0 0.0
    %939 = vmatpush1.msra.mxu0 0.0
    %940 = vmatprep.subr.mxu0 0.0
    %941 = vmatpush1.msra.mxu0 0.0
    %942 = vmatprep.subr.mxu0 0.0
    %943 = vmatpush1.msra.mxu0 0.0
    %944 = vmatprep.subr.mxu0 0.0
    %945 = vmatpush1.msra.mxu0 0.0
    %946 = vmatprep.subr.mxu0 0.0
    %947 = vmatpush1.msra.mxu0 0.0
    %948 = vmatprep.subr.mxu0 0.0
    %949 = vmatpush1.msra.mxu0 0.0
    %950 = vmatprep.subr.mxu0 0.0
    %951 = vmatpush1.msra.mxu0 0.0
    %952 = vmatprep.subr.mxu0 0.0
    %953 = vmatpush1.msra.mxu0 0.0
    %954 = vmatprep.mubr.f32.mxu0 0.0
    %v955 = vand.u32 %v509, 4294901760
    %956 = vmatmul.mubr.f32.gmra.mrb[0].mxu0 %v955
    %v957 = vpop.f32.mrb[0].mxu0
    %v958 = vadd.f32 %v886, %v957
    %v959 = vpop.f32.mrb[0].mxu0
    %960 = vdwg.mxu0
    %s961 = sld [smem:[#allocation2]]
    %v962 = vstv %s961
    %v963 = vrcp.pop %v962
    %v964 = vmul.f32 %v958, %v963
    %vm965 = vcmask 25600
    %v966 = vsel %vm965, %v964, -inf
    %967 = vmax.xlane.f32.xlu0 %v966
    %v968 = vpop.xlane.xlu0 %967
    %v969 = vsub.f32 %v964, %v968
    %v970 = vmul.f32 %v969, 1.442695
    %v971 = vpow.pop %v970
    %v972 = vsel %vm965, %v971, 0.0
    %973 = vadd.xlane.f32.xlu0 %v972
    %v974 = vpop.xlane.xlu0 %973
    %v975 = vrcp.pop %v974
    %v976 = vmul.f32 %v971, %v975
    %977 = vst.msk [vmem:[#allocation3] sm:$0x3] %vm965, %v976
    // Predicated region
    $region26: #{tpu_custom_call.1} parent=1 // pred_check
      _
    $region27: #{tpu_custom_call.1} parent=1 // pred_check_branch
      %979 = sbr.rel (0) target = $region29
    $region28: #{tpu_custom_call.1} parent=1 // pred_region
      %s981 = ssub.s32 32, 32
      %982 = vsyncadd [#allocation4], %s981
      %s984 = sshll.u32 [#allocation3], 4
      %s985 = int_to_ptr.vmem [resolvable:$true] %s984
      %987 = dma.vmem_to_hbm [thread:$0]  %s985, 32, %s6, [#allocation4]
    $region29: #{tpu_custom_call.1} parent=1 // pred_fallthru
      _
    // Predicated region
    $region30: #{tpu_custom_call.1} parent=1 // pred_check
      _
    $region31: #{tpu_custom_call.1} parent=1 // pred_check_branch
      %989 = sbr.rel (0) target = $region33
    $region32: #{tpu_custom_call.1} parent=1 // pred_region
      %990 = dma.done [#allocation4], 32
    $region33: #{tpu_custom_call.1} parent=1 // pred_fallthru
      _
    %991 = vsyncpa [#allocation4], 1

</llo_original>
